<compile_context>
chip_gen: v5e
topology: v5e:2x2
jax: 0.10.0
libtpu: 0.0.40
codegen_flags: <defaults>
</compile_context>

<pallas_src>
import jax
import jax.numpy as jnp
from jax.experimental import pallas as pl
from jax.experimental.pallas import tpu as pltpu

FEATURE_DIM = 512


def _round_up(x, m):
    return (x + m - 1) // m * m


def _clip_classifier_kernel(x_ref, wenc_ref, wcls_ref, bcls_ref, out_ref, acc_ref):
    # x_ref:    [tm, tk]        f32  (cast to bf16 in-kernel == x.half())
    # wenc_ref: [tk, 512]       bf16 (frozen image-encoder stand-in, no_grad)
    # wcls_ref: [512, NC_pad]   bf16 (classifier weight, transposed vs torch)
    # bcls_ref: [1, NC_pad]     f32  (classifier bias)
    # out_ref:  [tm, NC_pad]    f32
    # acc_ref:  [tm, 512]       f32  (feature accumulator, lives across k)
    k = pl.program_id(1)

    @pl.when(k == 0)
    def _():
        acc_ref[...] = jnp.zeros_like(acc_ref)

    # x.half() -> bf16, per-tile on the VPU (hidden under the MXU matmul).
    x_bf16 = x_ref[...].astype(jnp.bfloat16)
    acc_ref[...] += jnp.dot(
        x_bf16, wenc_ref[...], preferred_element_type=jnp.float32
    )

    @pl.when(k == pl.num_programs(1) - 1)
    def _():
        # features.float() -> classifier; bf16 x bf16 matmul, f32 accumulate,
        # f32 bias add. Done once per batch tile, not once per k step.
        feats = acc_ref[...].astype(jnp.bfloat16)
        logits = (
            jnp.dot(feats, wcls_ref[...], preferred_element_type=jnp.float32)
            + bcls_ref[...]
        )
        out_ref[...] = logits


def clip_linear_classifier(
    x_nchw,
    w_enc,
    w_cls,
    b_cls,
    *,
    tm=256,                       # batch tile (multiple of 128/256 for MXU)
    tk=2048,                      # d_in reduction tile (multiple of 128)
    vmem_limit_bytes=48 * 1024 * 1024,
):
    """x_nchw: [B, C, H, W] float32. Returns logits [B, num_classes] float32."""
    B = x_nchw.shape[0]
    d_in = x_nchw.shape[1] * x_nchw.shape[2] * x_nchw.shape[3]
    num_classes = w_cls.shape[1]

    # x stays f32 here; the kernel performs the .half() cast per tile.
    x_flat = x_nchw.reshape(B, d_in)

    # Frozen weights: bf16 cast is a no-op if already pre-cast by the caller.
    w_enc_b = w_enc.astype(jnp.bfloat16)
    w_cls_b = w_cls.astype(jnp.bfloat16)
    b_cls_f = b_cls.astype(jnp.float32)

    # --- Batch (M) tiling: full-array block if small, else pad to tm. ---
    if B <= tm:
        tm_eff = B
        b_pad = B
    else:
        tm_eff = tm
        b_pad = _round_up(B, tm)

    # --- Reduction (K) tiling: tk must be a multiple of 128 (lane dim). ---
    tk_eff = min(tk, _round_up(d_in, 128))
    d_in_pad = _round_up(d_in, tk_eff)

    # --- Classes (N): pad to a lane-dense multiple of 128. ---
    nc_pad = _round_up(num_classes, 128)

    if b_pad != B or d_in_pad != d_in:
        x_flat = jnp.pad(x_flat, ((0, b_pad - B), (0, d_in_pad - d_in)))
    if d_in_pad != d_in:
        w_enc_b = jnp.pad(w_enc_b, ((0, d_in_pad - d_in), (0, 0)))
    if nc_pad != num_classes:
        w_cls_b = jnp.pad(w_cls_b, ((0, 0), (0, nc_pad - num_classes)))
        b_cls_f = jnp.pad(b_cls_f, ((0, nc_pad - num_classes),))
    b_cls_2d = b_cls_f.reshape(1, nc_pad)

    grid = (b_pad // tm_eff, d_in_pad // tk_eff)

    logits_pad = pl.pallas_call(
        _clip_classifier_kernel,
        out_shape=jax.ShapeDtypeStruct((b_pad, nc_pad), jnp.float32),
        grid_spec=pltpu.PrefetchScalarGridSpec(
            num_scalar_prefetch=0,
            grid=grid,
            in_specs=[
                pl.BlockSpec((tm_eff, tk_eff), lambda i, k: (i, k)),
                pl.BlockSpec((tk_eff, FEATURE_DIM), lambda i, k: (k, 0)),
                pl.BlockSpec((FEATURE_DIM, nc_pad), lambda i, k: (0, 0)),
                pl.BlockSpec((1, nc_pad), lambda i, k: (0, 0)),
            ],
            out_specs=pl.BlockSpec((tm_eff, nc_pad), lambda i, k: (i, 0)),
            scratch_shapes=[pltpu.VMEM((tm_eff, FEATURE_DIM), jnp.float32)],
        ),
        compiler_params=pltpu.CompilerParams(
            dimension_semantics=("parallel", "arbitrary"),
            vmem_limit_bytes=vmem_limit_bytes,
        ),
    )(x_flat, w_enc_b, w_cls_b, b_cls_2d)

    return logits_pad[:B, :num_classes]


if __name__ == "__main__":
    # Small, deterministic example shapes.
    B, C, H, W = 2, 4, 16, 16
    num_classes = 10
    d_in = C * H * W

    key = jax.random.PRNGKey(0)
    k_x, k_enc, k_wc, k_bc = jax.random.split(key, 4)

    x = jax.random.normal(k_x, (B, C, H, W), dtype=jnp.float32)
    # Frozen stand-in image encoder weights (clip_model.visual surrogate),
    # pre-cast to bf16 once (not on the per-call hot path).
    w_enc = (
        jax.random.normal(k_enc, (d_in, FEATURE_DIM), dtype=jnp.float32) * 0.02
    ).astype(jnp.bfloat16)
    # nn.Linear(512, num_classes): weight [num_classes, 512] in torch; we keep
    # the transposed [512, num_classes] layout for a row-major matmul.
    w_cls = (
        jax.random.normal(k_wc, (FEATURE_DIM, num_classes), dtype=jnp.float32) * 0.02
    )
    b_cls = jax.random.normal(k_bc, (num_classes,), dtype=jnp.float32) * 0.01

    # tk=512 here so the toy case exercises the tiled reduction path
    # (grid = (1, 2): accumulator init + finalize both run).
    logits = clip_linear_classifier(x, w_enc, w_cls, b_cls, tk=512)
    jax.block_until_ready(logits)

    # Pure-JAX reference matching the kernel's precision path.
    x_flat_bf16 = x.reshape(B, d_in).astype(jnp.bfloat16)
    feats_ref = jnp.dot(x_flat_bf16, w_enc, preferred_element_type=jnp.float32)
    logits_ref = (
        jnp.dot(
            feats_ref.astype(jnp.bfloat16),
            w_cls.astype(jnp.bfloat16),
            preferred_element_type=jnp.float32,
        )
        + b_cls
    )

    assert logits.shape == (B, num_classes)
    assert jnp.allclose(logits, logits_ref, atol=5e-2, rtol=5e-2), float(
        jnp.max(jnp.abs(logits - logits_ref))
    )

    print("KERNEL_OK")
</pallas_src>

<mosaic_0001>
module attributes {stable_mosaic.version = 11 : i64} {
  func.func @_clip_classifier_kernel(%arg0: i32, %arg1: i32, %arg2: memref<2x512xf32, #tpu.memory_space<vmem>>, %arg3: memref<512x512xbf16, #tpu.memory_space<vmem>>, %arg4: memref<512x128xbf16, #tpu.memory_space<vmem>>, %arg5: memref<1x128xf32, #tpu.memory_space<vmem>>, %arg6: memref<2x128xf32, #tpu.memory_space<vmem>>, %arg7: memref<2x512xf32, #tpu.memory_space<vmem>>) attributes {dimension_semantics = [#tpu.dimension_semantics<parallel>, #tpu.dimension_semantics<arbitrary>], iteration_bounds = array<i64: 1, 2>, scalar_prefetch = 0 : i64, scratch_operands = 1 : i64, tpu.core_type = #tpu.core_type<tc>, window_params = [{transform_indices = @transform_0, window_bounds = array<i64: 2, 512>}, {transform_indices = @transform_1, window_bounds = array<i64: 512, 512>}, {pipeline_mode = #tpu.pipeline_mode<synchronous>, transform_indices = @transform_2, window_bounds = array<i64: 512, 128>}, {pipeline_mode = #tpu.pipeline_mode<synchronous>, transform_indices = @transform_3, window_bounds = array<i64: 1, 128>}, {transform_indices = @transform_4, window_bounds = array<i64: 2, 128>}]} {
    %c0_i32 = arith.constant 0 : i32
    %0 = arith.cmpi eq, %arg1, %c0_i32 : i32
    %1 = arith.extui %0 : i1 to i32
    %c0_i32_0 = arith.constant 0 : i32
    %2 = arith.cmpi ne, %1, %c0_i32_0 : i32
    scf.if %2 {
      %cst_9 = arith.constant 0.000000e+00 : f32
      %13 = vector.broadcast %cst_9 : f32 to vector<2x512xf32>
      %c0_10 = arith.constant 0 : index
      %c0_11 = arith.constant 0 : index
      %14 = vector.load %arg7[%c0_10, %c0_11] : memref<2x512xf32, #tpu.memory_space<vmem>>, vector<2x512xf32>
      tpu.vector_store %arg7[%c0_10, %c0_11], %13 {strides = array<i32>} : memref<2x512xf32, #tpu.memory_space<vmem>>, vector<2x512xf32>,
    } else {
    }
    %c0 = arith.constant 0 : index
    %c0_1 = arith.constant 0 : index
    %3 = vector.load %arg2[%c0, %c0_1] : memref<2x512xf32, #tpu.memory_space<vmem>>, vector<2x512xf32>
    %4 = arith.truncf %3 : vector<2x512xf32> to vector<2x512xbf16>
    %c0_2 = arith.constant 0 : index
    %c0_3 = arith.constant 0 : index
    %5 = vector.load %arg7[%c0_2, %c0_3] : memref<2x512xf32, #tpu.memory_space<vmem>>, vector<2x512xf32>
    %c0_4 = arith.constant 0 : index
    %c0_5 = arith.constant 0 : index
    %6 = vector.load %arg3[%c0_4, %c0_5] : memref<512x512xbf16, #tpu.memory_space<vmem>>, vector<512x512xbf16>
    %cst = arith.constant dense<0.000000e+00> : vector<2x512xf32>
    %7 = tpu.matmul %4, %6, %cst {dimension_numbers = #tpu.dot_dimension_numbers<[1], [0], [0], [1], [0, 0, 1, 1], [], []>} : vector<2x512xbf16>, vector<512x512xbf16>, vector<2x512xf32> -> vector<2x512xf32>
    %8 = arith.addf %5, %7 : vector<2x512xf32>
    %c0_6 = arith.constant 0 : index
    %c0_7 = arith.constant 0 : index
    %9 = vector.load %arg7[%c0_6, %c0_7] : memref<2x512xf32, #tpu.memory_space<vmem>>, vector<2x512xf32>
    tpu.vector_store %arg7[%c0_6, %c0_7], %8 {strides = array<i32>} : memref<2x512xf32, #tpu.memory_space<vmem>>, vector<2x512xf32>,
    %c1_i32 = arith.constant 1 : i32
    %10 = arith.cmpi eq, %arg1, %c1_i32 : i32
    %11 = arith.extui %10 : i1 to i32
    %c0_i32_8 = arith.constant 0 : i32
    %12 = arith.cmpi ne, %11, %c0_i32_8 : i32
    scf.if %12 {
      %c0_9 = arith.constant 0 : index
      %c0_10 = arith.constant 0 : index
      %13 = vector.load %arg7[%c0_9, %c0_10] : memref<2x512xf32, #tpu.memory_space<vmem>>, vector<2x512xf32>
      %14 = arith.truncf %13 : vector<2x512xf32> to vector<2x512xbf16>
      %c0_11 = arith.constant 0 : index
      %c0_12 = arith.constant 0 : index
      %15 = vector.load %arg4[%c0_11, %c0_12] : memref<512x128xbf16, #tpu.memory_space<vmem>>, vector<512x128xbf16>
      %cst_13 = arith.constant dense<0.000000e+00> : vector<2x128xf32>
      %16 = tpu.matmul %14, %15, %cst_13 {dimension_numbers = #tpu.dot_dimension_numbers<[1], [0], [0], [1], [0, 0, 1, 1], [], []>} : vector<2x512xbf16>, vector<512x128xbf16>, vector<2x128xf32> -> vector<2x128xf32>
      %c0_14 = arith.constant 0 : index
      %c0_15 = arith.constant 0 : index
      %17 = vector.load %arg5[%c0_14, %c0_15] : memref<1x128xf32, #tpu.memory_space<vmem>>, vector<1x128xf32>
      %18 = vector.broadcast %17 : vector<1x128xf32> to vector<2x128xf32>
      %19 = arith.addf %16, %18 : vector<2x128xf32>
      %c0_16 = arith.constant 0 : index
      %c0_17 = arith.constant 0 : index
      %20 = vector.load %arg6[%c0_16, %c0_17] : memref<2x128xf32, #tpu.memory_space<vmem>>, vector<2x128xf32>
      tpu.vector_store %arg6[%c0_16, %c0_17], %19 {strides = array<i32>} : memref<2x128xf32, #tpu.memory_space<vmem>>, vector<2x128xf32>,
    } else {
    }
    return
  }
  func.func @transform_0(%arg0: i32, %arg1: i32) -> (i32, i32) {
    %c0_i32 = arith.constant 0 : i32
    return %arg0, %arg1 : i32, i32
  }
  func.func @transform_1(%arg0: i32, %arg1: i32) -> (i32, i32) {
    %c0_i32 = arith.constant 0 : i32
    %c0_i32_0 = arith.constant 0 : i32
    return %arg1, %c0_i32 : i32, i32
  }
  func.func @transform_2(%arg0: i32, %arg1: i32) -> (i32, i32) {
    %c0_i32 = arith.constant 0 : i32
    %c0_i32_0 = arith.constant 0 : i32
    %c0_i32_1 = arith.constant 0 : i32
    return %c0_i32, %c0_i32_0 : i32, i32
  }
  func.func @transform_3(%arg0: i32, %arg1: i32) -> (i32, i32) {
    %c0_i32 = arith.constant 0 : i32
    %c0_i32_0 = arith.constant 0 : i32
    %c0_i32_1 = arith.constant 0 : i32
    return %c0_i32, %c0_i32_0 : i32, i32
  }
  func.func @transform_4(%arg0: i32, %arg1: i32) -> (i32, i32) {
    %c0_i32 = arith.constant 0 : i32
    %c0_i32_0 = arith.constant 0 : i32
    return %arg0, %c0_i32 : i32, i32
  }
}

</mosaic_0001>

<llo_original>
// kernel: tpu_custom_call.1
$region0: #{tpu_custom_call.1}
  #allocation0 [shape = 'u32[]', space=smem, size = 0x4, offset = 0x4, fixed_abs, tag = 'smem constant byte address 0x4 - core index']
  #allocation1 [shape = 'u32[72,128]{1,0:T(1,128)}', space=vmem, size = 0x9000, scoped, tag = 'internal scratch']
  #allocation2 [shape = 'f32[2,512]{1,0:T(2,128)}', space=vmem, size = 0x1000, scoped, tag = 'scratch operand']
  %s0 = inlined_call_operand.hbm [shape: f32[2,1024], index: 0, kind: input, shape index: {}]
  %s1 = inlined_call_operand.hbm [shape: bf16[1024,512], index: 1, kind: input, shape index: {}]
  %s2 = inlined_call_operand.hbm [shape: bf16[512,128], index: 2, kind: input, shape index: {}]
  %s3 = inlined_call_operand.vmem [shape: f32[1,128], index: 3, kind: input, shape index: {}]
  %s4 = inlined_call_operand.hbm [shape: f32[2,128], index: 4, kind: output, shape index: {}]
  %s5 = sld [smem:[#allocation0]]
  $region69: #{tpu_custom_call.1} parent=0
    _
  %s7 = ssub.s32 1, %s5
  %s8 = scalar_select 0, %s7, %s5
  $region1: #{tpu_custom_call.1} parent=0
    #allocation3 [shape = 'u8[8192]{0}', space=vmem, size = 0x2000, scoped, tag = 'input window, operand 0']
    #allocation4 [shape = 's32[2]{0}', space=sflag, size = 0x8, scoped, tag = 'scoped memory for tpu_custom_call.1']
    #allocation5 [shape = 's32[2]{0}', space=sflag, size = 0x8, scoped, tag = 'scoped memory for tpu_custom_call.1']
    #allocation6 [shape = 'u8[1048576]{0}', space=vmem, size = 0x100000, scoped, tag = 'input window, operand 1']
    #allocation7 [shape = 's32[2]{0}', space=sflag, size = 0x8, scoped, tag = 'scoped memory for tpu_custom_call.1']
    #allocation8 [shape = 'u8[131072]{0}', space=vmem, size = 0x20000, scoped, tag = 'input window, operand 2, single buffered']
    #allocation9 [shape = 'u8[1024]{0}', space=vmem, size = 0x400, scoped, tag = 'output window, operand 0, single buffered']
    %9 = vsyncpa [#allocation4], 0
    %s10 = scalar_lea.sflag [#allocation4], 1
    %11 = vsyncpa %s10, 0
    %12 = vsyncpa [#allocation7], 0
    %s13 = scalar_lea.sflag [#allocation7], 1
    %14 = vsyncpa %s13, 0
    %15 = vsyncpa [#allocation5], 0
    loop: start=0, step=1, limit=4
    $region2: #{tpu_custom_call.1} parent=1 // loop_pre_header
      _
    $region3: #{tpu_custom_call.1} parent=1 // loop_header
      %s17 = sphi 0, %s21
      %p18 = scmp.ge.s32.totalorder %s17, 4
      %s24 = sphi 0, %s36
      %s25 = sphi 0, %s32
      %s26 = sphi 0, %s24
      %s27 = sphi 0, %s25
      %s28 = sphi 0, %s26
      %s29 = sphi 0, %s27
      %s41 = sphi 0, %s43
      %s44 = sphi 0, %s41
      %s45 = sphi 0, %s44
      %s61 = sphi 0, %s45
      %s67 = sphi 0, %s69
      %s70 = sphi 0, %s67
      %s71 = sphi 0, %s70
      %s87 = sphi 0, %s71
      %s91 = sphi 0, %s91
      %s93 = sphi 0, %s91
      %s94 = sphi 0, %s93
      %s108 = sphi 0, %s94
      %s112 = sphi 0, %s112
      %s114 = sphi 0, %s112
      %s115 = sphi 0, %s114
      %s129 = sphi 0, %s115
      %s135 = sphi 0, %s137
      %s138 = sphi 0, %s135
      %s139 = sphi 0, %s138
      %s155 = sphi 0, %s139
    $region4: #{tpu_custom_call.1} parent=1 // loop_header_branch
      %20 = sbr.rel (%p18) target = $region8
    $region5: #{tpu_custom_call.1} parent=1 // loop_body
      %s22 = ssub.s32 %s17, 1
      %s23 = ssub.s32 %s17, 2
      %s30 = sadd.s32 1, %s25
      %p31 = scmp.ge.s32.totalorder %s30, 2
      %s32 = scalar_select %p31, 0, %s30
      %s33 = sadd.s32 1, %s24
      %s34 = scalar_select %p31, %s33, %s24
      %p35 = scmp.ge.s32.totalorder %s34, 1
      %s36 = scalar_select %p35, 0, %s34
      %s37 = ssub.s32 %s24, %s36
      %s38 = ssub.s32 %s25, %s32
      %s39 = sor.u32 %s37, %s38
      %p40 = scmp.eq.s32.totalorder %s39, 0
      %s42 = sadd.s32 %s41, 1
      %s43 = scalar_select %p40, %s41, %s42
      %p46 = pneg %p40
      %p47 = scmp.eq.s32.totalorder %s17, 1
      %p48 = por %p46, %p47
      %p49 = scmp.ne.s32.totalorder %s41, %s44
      %p50 = scmp.eq.s32.totalorder %s17, 0
      %p51 = por %p49, %p50
      %p52 = scmp.ne.s32.totalorder %s41, %s44
      %p53 = scmp.eq.s32.totalorder %s22, 1
      %p54 = por %p52, %p53
      %p55 = scmp.ne.s32.totalorder %s44, %s45
      %p56 = scmp.eq.s32.totalorder %s22, 0
      %p57 = por %p55, %p56
      %p58 = scmp.ne.s32.totalorder %s44, %s45
      %p59 = scmp.eq.s32.totalorder %s23, 1
      %p60 = por %p58, %p59
      %p62 = scmp.ne.s32.totalorder %s45, %s61
      %p63 = scmp.eq.s32.totalorder %s23, 0
      %p64 = por %p62, %p63
      %s65 = ssub.s32 %s25, %s32
      %p66 = scmp.eq.s32.totalorder %s65, 0
      %s68 = sadd.s32 %s67, 1
      %s69 = scalar_select %p66, %s67, %s68
      %p72 = pneg %p66
      %p73 = scmp.eq.s32.totalorder %s17, 1
      %p74 = por %p72, %p73
      %p75 = scmp.ne.s32.totalorder %s67, %s70
      %p76 = scmp.eq.s32.totalorder %s17, 0
      %p77 = por %p75, %p76
      %p78 = scmp.ne.s32.totalorder %s67, %s70
      %p79 = scmp.eq.s32.totalorder %s22, 1
      %p80 = por %p78, %p79
      %p81 = scmp.ne.s32.totalorder %s70, %s71
      %p82 = scmp.eq.s32.totalorder %s22, 0
      %p83 = por %p81, %p82
      %p84 = scmp.ne.s32.totalorder %s70, %s71
      %p85 = scmp.eq.s32.totalorder %s23, 1
      %p86 = por %p84, %p85
      %p88 = scmp.ne.s32.totalorder %s71, %s87
      %p89 = scmp.eq.s32.totalorder %s23, 0
      %p90 = por %p88, %p89
      %s92 = sadd.s32 %s91, 1
      %p95 = scmp.eq.s32.totalorder %s17, 1
      %p96 = scmp.ne.s32.totalorder %s91, %s93
      %p97 = scmp.eq.s32.totalorder %s17, 0
      %p98 = por %p96, %p97
      %p99 = scmp.ne.s32.totalorder %s91, %s93
      %p100 = scmp.eq.s32.totalorder %s22, 1
      %p101 = por %p99, %p100
      %p102 = scmp.ne.s32.totalorder %s93, %s94
      %p103 = scmp.eq.s32.totalorder %s22, 0
      %p104 = por %p102, %p103
      %p105 = scmp.ne.s32.totalorder %s93, %s94
      %p106 = scmp.eq.s32.totalorder %s23, 1
      %p107 = por %p105, %p106
      %p109 = scmp.ne.s32.totalorder %s94, %s108
      %p110 = scmp.eq.s32.totalorder %s23, 0
      %p111 = por %p109, %p110
      %s113 = sadd.s32 %s112, 1
      %p116 = scmp.eq.s32.totalorder %s17, 1
      %p117 = scmp.ne.s32.totalorder %s112, %s114
      %p118 = scmp.eq.s32.totalorder %s17, 0
      %p119 = por %p117, %p118
      %p120 = scmp.ne.s32.totalorder %s112, %s114
      %p121 = scmp.eq.s32.totalorder %s22, 1
      %p122 = por %p120, %p121
      %p123 = scmp.ne.s32.totalorder %s114, %s115
      %p124 = scmp.eq.s32.totalorder %s22, 0
      %p125 = por %p123, %p124
      %p126 = scmp.ne.s32.totalorder %s114, %s115
      %p127 = scmp.eq.s32.totalorder %s23, 1
      %p128 = por %p126, %p127
      %p130 = scmp.ne.s32.totalorder %s115, %s129
      %p131 = scmp.eq.s32.totalorder %s23, 0
      %p132 = por %p130, %p131
      %s133 = ssub.s32 %s24, %s36
      %p134 = scmp.eq.s32.totalorder %s133, 0
      %s136 = sadd.s32 %s135, 1
      %s137 = scalar_select %p134, %s135, %s136
      %p140 = pneg %p134
      %p141 = scmp.eq.s32.totalorder %s17, 1
      %p142 = por %p140, %p141
      %p143 = scmp.ne.s32.totalorder %s135, %s138
      %p144 = scmp.eq.s32.totalorder %s17, 0
      %p145 = por %p143, %p144
      %p146 = scmp.ne.s32.totalorder %s135, %s138
      %p147 = scmp.eq.s32.totalorder %s22, 1
      %p148 = por %p146, %p147
      %p149 = scmp.ne.s32.totalorder %s138, %s139
      %p150 = scmp.eq.s32.totalorder %s22, 0
      %p151 = por %p149, %p150
      %p152 = scmp.ne.s32.totalorder %s138, %s139
      %p153 = scmp.eq.s32.totalorder %s23, 1
      %p154 = por %p152, %p153
      %p156 = scmp.ne.s32.totalorder %s139, %s155
      %p157 = scmp.eq.s32.totalorder %s23, 0
      %p158 = por %p156, %p157
      %p159 = scmp.le.s32.totalorder 1, %s17
      %p160 = scmp.lt.s32.totalorder %s17, 3
      %p161 = pnand %p159, %p160
      %p162 = pneg %p161
      // Predicated region
      $region9: #{tpu_custom_call.1} parent=5 // pred_check
        _
      $region10: #{tpu_custom_call.1} parent=5 // pred_check_branch
        %164 = sbr.rel (%p161) target = $region12
      $region11: #{tpu_custom_call.1} parent=5 // pred_region
        %s165 = ssub.s32 %s17, 1
        // Predicated region
        $region13: #{tpu_custom_call.1} parent=11 // pred_check
          %p166 = pneg %p104
        $region14: #{tpu_custom_call.1} parent=11 // pred_check_branch
          %168 = sbr.rel (%p166) target = $region16
        $region15: #{tpu_custom_call.1} parent=11 // pred_region
          %170 = vsyncadd [#allocation7], 0
          %s171 = sshll.u32 %s2, 4
          %s172 = int_to_ptr.hbm [resolvable:$true] %s171
          %s173 = sshll.u32 [#allocation8], 4
          %s174 = int_to_ptr.vmem [resolvable:$true] %s173
          %179 = dma.hbm_to_vmem [thread:$0]  %s172, 4096, %s174, [#allocation7], 64, 64, 4
        $region16: #{tpu_custom_call.1} parent=11 // pred_fallthru
          _
        // Predicated region
        $region17: #{tpu_custom_call.1} parent=11 // pred_check
          %p180 = pneg %p125
        $region18: #{tpu_custom_call.1} parent=11 // pred_check_branch
          %182 = sbr.rel (%p180) target = $region20
        $region19: #{tpu_custom_call.1} parent=11 // pred_region
          _
        $region20: #{tpu_custom_call.1} parent=11 // pred_fallthru
          _
      $region12: #{tpu_custom_call.1} parent=5 // pred_fallthru
        _
      %p183 = scmp.lt.s32.totalorder %s17, 2
      // Predicated region
      $region21: #{tpu_custom_call.1} parent=5 // pred_check
        %p184 = pneg %p183
      $region22: #{tpu_custom_call.1} parent=5 // pred_check_branch
        %186 = sbr.rel (%p184) target = $region24
      $region23: #{tpu_custom_call.1} parent=5 // pred_region
        // Predicated region
        $region25: #{tpu_custom_call.1} parent=23 // pred_check
          %p187 = pneg %p51
        $region26: #{tpu_custom_call.1} parent=23 // pred_check_branch
          %189 = sbr.rel (%p187) target = $region28
        $region27: #{tpu_custom_call.1} parent=23 // pred_region
          %s190 = sand.u32 %s41, 1
          %s191 = scalar_lea.sflag [#allocation4], %s190
          %s192 = sand.u32 %s41, 1
          %s193 = smul.addr %s192, 8
          %s194 = scalar_lea.vmem [#allocation3], %s193
          %s195 = smul.u32 4, %s25
          %197 = vsyncadd %s191, 0
          %s198 = smul.addr %s24, 8
          %s199 = sadd.s32 %s195, %s198
          %s200 = smul.addr %s199, 2
          %s201 = scalar_lea.hbm %s0, %s200
          %s203 = sshll.u32 %s201, 4
          %s204 = int_to_ptr.hbm [resolvable:$true] %s203
          %s205 = sshll.u32 %s194, 4
          %s206 = int_to_ptr.vmem [resolvable:$true] %s205
          %208 = dma.hbm_to_vmem [thread:$0]  %s204, 128, %s206, %s191
        $region28: #{tpu_custom_call.1} parent=23 // pred_fallthru
          _
        // Predicated region
        $region29: #{tpu_custom_call.1} parent=23 // pred_check
          %p209 = pneg %p77
        $region30: #{tpu_custom_call.1} parent=23 // pred_check_branch
          %211 = sbr.rel (%p209) target = $region32
        $region31: #{tpu_custom_call.1} parent=23 // pred_region
          %s212 = sand.u32 %s17, 1
          %s213 = scalar_lea.sflag [#allocation7], %s212
          %s214 = sand.u32 %s67, 1
          %s215 = smul.addr %s214, 1024
          %s216 = scalar_lea.vmem [#allocation6], %s215
          %s217 = smul.u32 64, %s25
          %219 = vsyncadd %s213, 0
          %s220 = smul.addr %s217, 4
          %s221 = smul.addr %s220, 4
          %s222 = scalar_lea.hbm %s1, %s221
          %s223 = sshll.u32 %s222, 4
          %s224 = int_to_ptr.hbm [resolvable:$true] %s223
          %s225 = sshll.u32 %s216, 4
          %s226 = int_to_ptr.vmem [resolvable:$true] %s225
          %231 = dma.hbm_to_vmem [thread:$0]  %s224, 16384, %s226, %s213, 256, 256, 16
        $region32: #{tpu_custom_call.1} parent=23 // pred_fallthru
          _
      $region24: #{tpu_custom_call.1} parent=5 // pred_fallthru
        _
      %p232 = scmp.le.s32.totalorder 1, %s17
      %p233 = scmp.lt.s32.totalorder %s17, 3
      %p234 = pnand %p232, %p233
      %p235 = pneg %p234
      // Predicated region
      $region33: #{tpu_custom_call.1} parent=5 // pred_check
        _
      $region34: #{tpu_custom_call.1} parent=5 // pred_check_branch
        %237 = sbr.rel (%p234) target = $region36
      $region35: #{tpu_custom_call.1} parent=5 // pred_region
        %s238 = ssub.s32 %s17, 1
        %s239 = sand.u32 %s44, 1
        %s240 = scalar_lea.sflag [#allocation4], %s239
        %s241 = sand.u32 %s44, 1
        %s242 = smul.addr %s241, 8
        %s243 = scalar_lea.vmem [#allocation3], %s242
        // Predicated region
        $region37: #{tpu_custom_call.1} parent=35 // pred_check
          %p244 = pneg %p57
        $region38: #{tpu_custom_call.1} parent=35 // pred_check_branch
          %246 = sbr.rel (%p244) target = $region40
        $region39: #{tpu_custom_call.1} parent=35 // pred_region
          %248 = dma.done %s240, 128
        $region40: #{tpu_custom_call.1} parent=35 // pred_fallthru
          _
        %s249 = sand.u32 %s22, 1
        %s250 = scalar_lea.sflag [#allocation7], %s249
        %s251 = sand.u32 %s70, 1
        %s252 = smul.addr %s251, 1024
        %s253 = scalar_lea.vmem [#allocation6], %s252
        // Predicated region
        $region41: #{tpu_custom_call.1} parent=35 // pred_check
          %p254 = pneg %p83
        $region42: #{tpu_custom_call.1} parent=35 // pred_check_branch
          %256 = sbr.rel (%p254) target = $region44
        $region43: #{tpu_custom_call.1} parent=35 // pred_region
          %258 = dma.done %s250, 16384
        $region44: #{tpu_custom_call.1} parent=35 // pred_fallthru
          _
        // Predicated region
        $region45: #{tpu_custom_call.1} parent=35 // pred_check
          %p259 = pneg %p104
        $region46: #{tpu_custom_call.1} parent=35 // pred_check_branch
          %261 = sbr.rel (%p259) target = $region48
        $region47: #{tpu_custom_call.1} parent=35 // pred_region
          %263 = dma.done [#allocation7], 4096
        $region48: #{tpu_custom_call.1} parent=35 // pred_fallthru
          _
        %s264 = sand.u32 %s44, 1
        %s265 = scalar_lea.sflag [#allocation4], %s264
        %s266 = sand.u32 %s44, 1
        %s267 = smul.addr %s266, 8
        %s268 = scalar_lea.vmem [#allocation3], %s267
        %p269 = pneg %p57
        %p270 = pneg %p54
        %s271 = sand.u32 %s22, 1
        %s272 = scalar_lea.sflag [#allocation7], %s271
        %s273 = sand.u32 %s70, 1
        %s274 = smul.addr %s273, 1024
        %s275 = scalar_lea.vmem [#allocation6], %s274
        %p276 = pneg %p83
        %p277 = pneg %p80
        %p278 = pneg %p104
        %p279 = pneg %p101
        %p280 = pneg %p125
        %p281 = pneg %p122
        %p282 = pneg %p151
        %p283 = pneg %p148
        %s284 = smul.u32 4, %s27
        %s285 = smul.u32 64, %s27
        %p286 = scmp.eq.s32.totalorder %s27, 0
        // Predicated region
        $region49: #{tpu_custom_call.1} parent=35 // pred_check
          %p287 = pneg %p286
        $region50: #{tpu_custom_call.1} parent=35 // pred_check_branch
          %289 = sbr.rel (%p287) target = $region52
        $region51: #{tpu_custom_call.1} parent=35 // pred_region
          %290 = vst [vmem:[#allocation2] sm:$0xff] 0.0
        $region52: #{tpu_custom_call.1} parent=35 // pred_fallthru
          _
        %v291 = vld [vmem:[%s243] sm:$0xff]
        %293 = vst [vmem:[#allocation1] ss:$4 sm:$0xff] %v291
        %v294 = vld.sshfl [vmem:[#allocation1] sm:$0xff pattern:$0x73625140]
        %v295 = vld.sshfl [vmem:[#allocation1 + $0x8] sm:$0xff pattern:$0x73625140]
        %v296 = vld.sshfl [vmem:[#allocation1 + $0x10] sm:$0xff pattern:$0x73625140]
        %v297 = vld.sshfl [vmem:[#allocation1 + $0x18] sm:$0xff pattern:$0x73625140]
        %v302 = vpack.c.bf16 %v294, %v294
        %v303 = vpack.c.bf16 %v295, %v295
        %v304 = vpack.c.bf16 %v296, %v296
        %v305 = vpack.c.bf16 %v297, %v297
        %v306 = vld [vmem:[#allocation2] sm:$0xff]
        %v307 = vld [vmem:[%s253] sm:$0xff]
        %v308 = vld [vmem:[%s253 + $0x8] sm:$0xff]
        %v309 = vld [vmem:[%s253 + $0x10] sm:$0xff]
        %v310 = vld [vmem:[%s253 + $0x18] sm:$0xff]
        %v311 = vld [vmem:[%s253 + $0x20] sm:$0xff]
        %v312 = vld [vmem:[%s253 + $0x28] sm:$0xff]
        %v313 = vld [vmem:[%s253 + $0x30] sm:$0xff]
        %v314 = vld [vmem:[%s253 + $0x38] sm:$0xff]
        %v315 = vld [vmem:[%s253 + $0x40] sm:$0xff]
        %v316 = vld [vmem:[%s253 + $0x48] sm:$0xff]
        %v317 = vld [vmem:[%s253 + $0x50] sm:$0xff]
        %v318 = vld [vmem:[%s253 + $0x58] sm:$0xff]
        %v319 = vld [vmem:[%s253 + $0x60] sm:$0xff]
        %v320 = vld [vmem:[%s253 + $0x68] sm:$0xff]
        %v321 = vld [vmem:[%s253 + $0x70] sm:$0xff]
        %v322 = vld [vmem:[%s253 + $0x78] sm:$0xff]
        %v323 = vld [vmem:[%s253 + $0x80] sm:$0xff]
        %v324 = vld [vmem:[%s253 + $0x88] sm:$0xff]
        %v325 = vld [vmem:[%s253 + $0x90] sm:$0xff]
        %v326 = vld [vmem:[%s253 + $0x98] sm:$0xff]
        %v327 = vld [vmem:[%s253 + $0xa0] sm:$0xff]
        %v328 = vld [vmem:[%s253 + $0xa8] sm:$0xff]
        %v329 = vld [vmem:[%s253 + $0xb0] sm:$0xff]
        %v330 = vld [vmem:[%s253 + $0xb8] sm:$0xff]
        %v331 = vld [vmem:[%s253 + $0xc0] sm:$0xff]
        %v332 = vld [vmem:[%s253 + $0xc8] sm:$0xff]
        %v333 = vld [vmem:[%s253 + $0xd0] sm:$0xff]
        %v334 = vld [vmem:[%s253 + $0xd8] sm:$0xff]
        %v335 = vld [vmem:[%s253 + $0xe0] sm:$0xff]
        %v336 = vld [vmem:[%s253 + $0xe8] sm:$0xff]
        %v337 = vld [vmem:[%s253 + $0xf0] sm:$0xff]
        %v338 = vld [vmem:[%s253 + $0xf8] sm:$0xff]
        %v339 = vld [vmem:[%s253 + $0x100] sm:$0xff]
        %v340 = vld [vmem:[%s253 + $0x108] sm:$0xff]
        %v341 = vld [vmem:[%s253 + $0x110] sm:$0xff]
        %v342 = vld [vmem:[%s253 + $0x118] sm:$0xff]
        %v343 = vld [vmem:[%s253 + $0x120] sm:$0xff]
        %v344 = vld [vmem:[%s253 + $0x128] sm:$0xff]
        %v345 = vld [vmem:[%s253 + $0x130] sm:$0xff]
        %v346 = vld [vmem:[%s253 + $0x138] sm:$0xff]
        %v347 = vld [vmem:[%s253 + $0x140] sm:$0xff]
        %v348 = vld [vmem:[%s253 + $0x148] sm:$0xff]
        %v349 = vld [vmem:[%s253 + $0x150] sm:$0xff]
        %v350 = vld [vmem:[%s253 + $0x158] sm:$0xff]
        %v351 = vld [vmem:[%s253 + $0x160] sm:$0xff]
        %v352 = vld [vmem:[%s253 + $0x168] sm:$0xff]
        %v353 = vld [vmem:[%s253 + $0x170] sm:$0xff]
        %v354 = vld [vmem:[%s253 + $0x178] sm:$0xff]
        %v355 = vld [vmem:[%s253 + $0x180] sm:$0xff]
        %v356 = vld [vmem:[%s253 + $0x188] sm:$0xff]
        %v357 = vld [vmem:[%s253 + $0x190] sm:$0xff]
        %v358 = vld [vmem:[%s253 + $0x198] sm:$0xff]
        %v359 = vld [vmem:[%s253 + $0x1a0] sm:$0xff]
        %v360 = vld [vmem:[%s253 + $0x1a8] sm:$0xff]
        %v361 = vld [vmem:[%s253 + $0x1b0] sm:$0xff]
        %v362 = vld [vmem:[%s253 + $0x1b8] sm:$0xff]
        %v363 = vld [vmem:[%s253 + $0x1c0] sm:$0xff]
        %v364 = vld [vmem:[%s253 + $0x1c8] sm:$0xff]
        %v365 = vld [vmem:[%s253 + $0x1d0] sm:$0xff]
        %v366 = vld [vmem:[%s253 + $0x1d8] sm:$0xff]
        %v367 = vld [vmem:[%s253 + $0x1e0] sm:$0xff]
        %v368 = vld [vmem:[%s253 + $0x1e8] sm:$0xff]
        %v369 = vld [vmem:[%s253 + $0x1f0] sm:$0xff]
        %v370 = vld [vmem:[%s253 + $0x1f8] sm:$0xff]
        %v371 = vld [vmem:[%s253 + $0x200] sm:$0xff]
        %v372 = vld [vmem:[%s253 + $0x208] sm:$0xff]
        %v373 = vld [vmem:[%s253 + $0x210] sm:$0xff]
        %v374 = vld [vmem:[%s253 + $0x218] sm:$0xff]
        %v375 = vld [vmem:[%s253 + $0x220] sm:$0xff]
        %v376 = vld [vmem:[%s253 + $0x228] sm:$0xff]
        %v377 = vld [vmem:[%s253 + $0x230] sm:$0xff]
        %v378 = vld [vmem:[%s253 + $0x238] sm:$0xff]
        %v379 = vld [vmem:[%s253 + $0x240] sm:$0xff]
        %v380 = vld [vmem:[%s253 + $0x248] sm:$0xff]
        %v381 = vld [vmem:[%s253 + $0x250] sm:$0xff]
        %v382 = vld [vmem:[%s253 + $0x258] sm:$0xff]
        %v383 = vld [vmem:[%s253 + $0x260] sm:$0xff]
        %v384 = vld [vmem:[%s253 + $0x268] sm:$0xff]
        %v385 = vld [vmem:[%s253 + $0x270] sm:$0xff]
        %v386 = vld [vmem:[%s253 + $0x278] sm:$0xff]
        %v387 = vld [vmem:[%s253 + $0x280] sm:$0xff]
        %v388 = vld [vmem:[%s253 + $0x288] sm:$0xff]
        %v389 = vld [vmem:[%s253 + $0x290] sm:$0xff]
        %v390 = vld [vmem:[%s253 + $0x298] sm:$0xff]
        %v391 = vld [vmem:[%s253 + $0x2a0] sm:$0xff]
        %v392 = vld [vmem:[%s253 + $0x2a8] sm:$0xff]
        %v393 = vld [vmem:[%s253 + $0x2b0] sm:$0xff]
        %v394 = vld [vmem:[%s253 + $0x2b8] sm:$0xff]
        %v395 = vld [vmem:[%s253 + $0x2c0] sm:$0xff]
        %v396 = vld [vmem:[%s253 + $0x2c8] sm:$0xff]
        %v397 = vld [vmem:[%s253 + $0x2d0] sm:$0xff]
        %v398 = vld [vmem:[%s253 + $0x2d8] sm:$0xff]
        %v399 = vld [vmem:[%s253 + $0x2e0] sm:$0xff]
        %v400 = vld [vmem:[%s253 + $0x2e8] sm:$0xff]
        %v401 = vld [vmem:[%s253 + $0x2f0] sm:$0xff]
        %v402 = vld [vmem:[%s253 + $0x2f8] sm:$0xff]
        %v403 = vld [vmem:[%s253 + $0x300] sm:$0xff]
        %v404 = vld [vmem:[%s253 + $0x308] sm:$0xff]
        %v405 = vld [vmem:[%s253 + $0x310] sm:$0xff]
        %v406 = vld [vmem:[%s253 + $0x318] sm:$0xff]
        %v407 = vld [vmem:[%s253 + $0x320] sm:$0xff]
        %v408 = vld [vmem:[%s253 + $0x328] sm:$0xff]
        %v409 = vld [vmem:[%s253 + $0x330] sm:$0xff]
        %v410 = vld [vmem:[%s253 + $0x338] sm:$0xff]
        %v411 = vld [vmem:[%s253 + $0x340] sm:$0xff]
        %v412 = vld [vmem:[%s253 + $0x348] sm:$0xff]
        %v413 = vld [vmem:[%s253 + $0x350] sm:$0xff]
        %v414 = vld [vmem:[%s253 + $0x358] sm:$0xff]
        %v415 = vld [vmem:[%s253 + $0x360] sm:$0xff]
        %v416 = vld [vmem:[%s253 + $0x368] sm:$0xff]
        %v417 = vld [vmem:[%s253 + $0x370] sm:$0xff]
        %v418 = vld [vmem:[%s253 + $0x378] sm:$0xff]
        %v419 = vld [vmem:[%s253 + $0x380] sm:$0xff]
        %v420 = vld [vmem:[%s253 + $0x388] sm:$0xff]
        %v421 = vld [vmem:[%s253 + $0x390] sm:$0xff]
        %v422 = vld [vmem:[%s253 + $0x398] sm:$0xff]
        %v423 = vld [vmem:[%s253 + $0x3a0] sm:$0xff]
        %v424 = vld [vmem:[%s253 + $0x3a8] sm:$0xff]
        %v425 = vld [vmem:[%s253 + $0x3b0] sm:$0xff]
        %v426 = vld [vmem:[%s253 + $0x3b8] sm:$0xff]
        %v427 = vld [vmem:[%s253 + $0x3c0] sm:$0xff]
        %v428 = vld [vmem:[%s253 + $0x3c8] sm:$0xff]
        %v429 = vld [vmem:[%s253 + $0x3d0] sm:$0xff]
        %v430 = vld [vmem:[%s253 + $0x3d8] sm:$0xff]
        %v431 = vld [vmem:[%s253 + $0x3e0] sm:$0xff]
        %v432 = vld [vmem:[%s253 + $0x3e8] sm:$0xff]
        %v433 = vld [vmem:[%s253 + $0x3f0] sm:$0xff]
        %v434 = vld [vmem:[%s253 + $0x3f8] sm:$0xff]
        %v563 = vunpack.c.l.b16 %v307
        %v564 = vunpack.c.h.b16 %v307
        %v565 = vunpack.c.l.b16 %v308
        %v566 = vunpack.c.h.b16 %v308
        %v567 = vunpack.c.l.b16 %v309
        %v568 = vunpack.c.h.b16 %v309
        %v569 = vunpack.c.l.b16 %v310
        %v570 = vunpack.c.h.b16 %v310
        %v571 = vunpack.c.l.b16 %v311
        %v572 = vunpack.c.h.b16 %v311
        %v573 = vunpack.c.l.b16 %v312
        %v574 = vunpack.c.h.b16 %v312
        %v575 = vunpack.c.l.b16 %v313
        %v576 = vunpack.c.h.b16 %v313
        %v577 = vunpack.c.l.b16 %v314
        %v578 = vunpack.c.h.b16 %v314
        %v579 = vunpack.c.l.b16 %v315
        %v580 = vunpack.c.h.b16 %v315
        %v581 = vunpack.c.l.b16 %v316
        %v582 = vunpack.c.h.b16 %v316
        %v583 = vunpack.c.l.b16 %v317
        %v584 = vunpack.c.h.b16 %v317
        %v585 = vunpack.c.l.b16 %v318
        %v586 = vunpack.c.h.b16 %v318
        %v587 = vunpack.c.l.b16 %v319
        %v588 = vunpack.c.h.b16 %v319
        %v589 = vunpack.c.l.b16 %v320
        %v590 = vunpack.c.h.b16 %v320
        %v591 = vunpack.c.l.b16 %v321
        %v592 = vunpack.c.h.b16 %v321
        %v593 = vunpack.c.l.b16 %v322
        %v594 = vunpack.c.h.b16 %v322
        %v595 = vunpack.c.l.b16 %v323
        %v596 = vunpack.c.h.b16 %v323
        %v597 = vunpack.c.l.b16 %v324
        %v598 = vunpack.c.h.b16 %v324
        %v599 = vunpack.c.l.b16 %v325
        %v600 = vunpack.c.h.b16 %v325
        %v601 = vunpack.c.l.b16 %v326
        %v602 = vunpack.c.h.b16 %v326
        %v603 = vunpack.c.l.b16 %v327
        %v604 = vunpack.c.h.b16 %v327
        %v605 = vunpack.c.l.b16 %v328
        %v606 = vunpack.c.h.b16 %v328
        %v607 = vunpack.c.l.b16 %v329
        %v608 = vunpack.c.h.b16 %v329
        %v609 = vunpack.c.l.b16 %v330
        %v610 = vunpack.c.h.b16 %v330
        %v611 = vunpack.c.l.b16 %v331
        %v612 = vunpack.c.h.b16 %v331
        %v613 = vunpack.c.l.b16 %v332
        %v614 = vunpack.c.h.b16 %v332
        %v615 = vunpack.c.l.b16 %v333
        %v616 = vunpack.c.h.b16 %v333
        %v617 = vunpack.c.l.b16 %v334
        %v618 = vunpack.c.h.b16 %v334
        %v619 = vunpack.c.l.b16 %v335
        %v620 = vunpack.c.h.b16 %v335
        %v621 = vunpack.c.l.b16 %v336
        %v622 = vunpack.c.h.b16 %v336
        %v623 = vunpack.c.l.b16 %v337
        %v624 = vunpack.c.h.b16 %v337
        %v625 = vunpack.c.l.b16 %v338
        %v626 = vunpack.c.h.b16 %v338
        %v627 = vunpack.c.l.b16 %v339
        %v628 = vunpack.c.h.b16 %v339
        %v629 = vunpack.c.l.b16 %v340
        %v630 = vunpack.c.h.b16 %v340
        %v631 = vunpack.c.l.b16 %v341
        %v632 = vunpack.c.h.b16 %v341
        %v633 = vunpack.c.l.b16 %v342
        %v634 = vunpack.c.h.b16 %v342
        %v635 = vunpack.c.l.b16 %v343
        %v636 = vunpack.c.h.b16 %v343
        %v637 = vunpack.c.l.b16 %v344
        %v638 = vunpack.c.h.b16 %v344
        %v639 = vunpack.c.l.b16 %v345
        %v640 = vunpack.c.h.b16 %v345
        %v641 = vunpack.c.l.b16 %v346
        %v642 = vunpack.c.h.b16 %v346
        %v643 = vunpack.c.l.b16 %v347
        %v644 = vunpack.c.h.b16 %v347
        %v645 = vunpack.c.l.b16 %v348
        %v646 = vunpack.c.h.b16 %v348
        %v647 = vunpack.c.l.b16 %v349
        %v648 = vunpack.c.h.b16 %v349
        %v649 = vunpack.c.l.b16 %v350
        %v650 = vunpack.c.h.b16 %v350
        %v651 = vunpack.c.l.b16 %v351
        %v652 = vunpack.c.h.b16 %v351
        %v653 = vunpack.c.l.b16 %v352
        %v654 = vunpack.c.h.b16 %v352
        %v655 = vunpack.c.l.b16 %v353
        %v656 = vunpack.c.h.b16 %v353
        %v657 = vunpack.c.l.b16 %v354
        %v658 = vunpack.c.h.b16 %v354
        %v659 = vunpack.c.l.b16 %v355
        %v660 = vunpack.c.h.b16 %v355
        %v661 = vunpack.c.l.b16 %v356
        %v662 = vunpack.c.h.b16 %v356
        %v663 = vunpack.c.l.b16 %v357
        %v664 = vunpack.c.h.b16 %v357
        %v665 = vunpack.c.l.b16 %v358
        %v666 = vunpack.c.h.b16 %v358
        %v667 = vunpack.c.l.b16 %v359
        %v668 = vunpack.c.h.b16 %v359
        %v669 = vunpack.c.l.b16 %v360
        %v670 = vunpack.c.h.b16 %v360
        %v671 = vunpack.c.l.b16 %v361
        %v672 = vunpack.c.h.b16 %v361
        %v673 = vunpack.c.l.b16 %v362
        %v674 = vunpack.c.h.b16 %v362
        %v675 = vunpack.c.l.b16 %v363
        %v676 = vunpack.c.h.b16 %v363
        %v677 = vunpack.c.l.b16 %v364
        %v678 = vunpack.c.h.b16 %v364
        %v679 = vunpack.c.l.b16 %v365
        %v680 = vunpack.c.h.b16 %v365
        %v681 = vunpack.c.l.b16 %v366
        %v682 = vunpack.c.h.b16 %v366
        %v683 = vunpack.c.l.b16 %v367
        %v684 = vunpack.c.h.b16 %v367
        %v685 = vunpack.c.l.b16 %v368
        %v686 = vunpack.c.h.b16 %v368
        %v687 = vunpack.c.l.b16 %v369
        %v688 = vunpack.c.h.b16 %v369
        %v689 = vunpack.c.l.b16 %v370
        %v690 = vunpack.c.h.b16 %v370
        %v691 = vunpack.c.l.b16 %v371
        %v692 = vunpack.c.h.b16 %v371
        %v693 = vunpack.c.l.b16 %v372
        %v694 = vunpack.c.h.b16 %v372
        %v695 = vunpack.c.l.b16 %v373
        %v696 = vunpack.c.h.b16 %v373
        %v697 = vunpack.c.l.b16 %v374
        %v698 = vunpack.c.h.b16 %v374
        %v699 = vunpack.c.l.b16 %v375
        %v700 = vunpack.c.h.b16 %v375
        %v701 = vunpack.c.l.b16 %v376
        %v702 = vunpack.c.h.b16 %v376
        %v703 = vunpack.c.l.b16 %v377
        %v704 = vunpack.c.h.b16 %v377
        %v705 = vunpack.c.l.b16 %v378
        %v706 = vunpack.c.h.b16 %v378
        %v707 = vunpack.c.l.b16 %v379
        %v708 = vunpack.c.h.b16 %v379
        %v709 = vunpack.c.l.b16 %v380
        %v710 = vunpack.c.h.b16 %v380
        %v711 = vunpack.c.l.b16 %v381
        %v712 = vunpack.c.h.b16 %v381
        %v713 = vunpack.c.l.b16 %v382
        %v714 = vunpack.c.h.b16 %v382
        %v715 = vunpack.c.l.b16 %v383
        %v716 = vunpack.c.h.b16 %v383
        %v717 = vunpack.c.l.b16 %v384
        %v718 = vunpack.c.h.b16 %v384
        %v719 = vunpack.c.l.b16 %v385
        %v720 = vunpack.c.h.b16 %v385
        %v721 = vunpack.c.l.b16 %v386
        %v722 = vunpack.c.h.b16 %v386
        %v723 = vunpack.c.l.b16 %v387
        %v724 = vunpack.c.h.b16 %v387
        %v725 = vunpack.c.l.b16 %v388
        %v726 = vunpack.c.h.b16 %v388
        %v727 = vunpack.c.l.b16 %v389
        %v728 = vunpack.c.h.b16 %v389
        %v729 = vunpack.c.l.b16 %v390
        %v730 = vunpack.c.h.b16 %v390
        %v731 = vunpack.c.l.b16 %v391
        %v732 = vunpack.c.h.b16 %v391
        %v733 = vunpack.c.l.b16 %v392
        %v734 = vunpack.c.h.b16 %v392
        %v735 = vunpack.c.l.b16 %v393
        %v736 = vunpack.c.h.b16 %v393
        %v737 = vunpack.c.l.b16 %v394
        %v738 = vunpack.c.h.b16 %v394
        %v739 = vunpack.c.l.b16 %v395
        %v740 = vunpack.c.h.b16 %v395
        %v741 = vunpack.c.l.b16 %v396
        %v742 = vunpack.c.h.b16 %v396
        %v743 = vunpack.c.l.b16 %v397
        %v744 = vunpack.c.h.b16 %v397
        %v745 = vunpack.c.l.b16 %v398
        %v746 = vunpack.c.h.b16 %v398
        %v747 = vunpack.c.l.b16 %v399
        %v748 = vunpack.c.h.b16 %v399
        %v749 = vunpack.c.l.b16 %v400
        %v750 = vunpack.c.h.b16 %v400
        %v751 = vunpack.c.l.b16 %v401
        %v752 = vunpack.c.h.b16 %v401
        %v753 = vunpack.c.l.b16 %v402
        %v754 = vunpack.c.h.b16 %v402
        %v755 = vunpack.c.l.b16 %v403
        %v756 = vunpack.c.h.b16 %v403
        %v757 = vunpack.c.l.b16 %v404
        %v758 = vunpack.c.h.b16 %v404
        %v759 = vunpack.c.l.b16 %v405
        %v760 = vunpack.c.h.b16 %v405
        %v761 = vunpack.c.l.b16 %v406
        %v762 = vunpack.c.h.b16 %v406
        %v763 = vunpack.c.l.b16 %v407
        %v764 = vunpack.c.h.b16 %v407
        %v765 = vunpack.c.l.b16 %v408
        %v766 = vunpack.c.h.b16 %v408
        %v767 = vunpack.c.l.b16 %v409
        %v768 = vunpack.c.h.b16 %v409
        %v769 = vunpack.c.l.b16 %v410
        %v770 = vunpack.c.h.b16 %v410
        %v771 = vunpack.c.l.b16 %v411
        %v772 = vunpack.c.h.b16 %v411
        %v773 = vunpack.c.l.b16 %v412
        %v774 = vunpack.c.h.b16 %v412
        %v775 = vunpack.c.l.b16 %v413
        %v776 = vunpack.c.h.b16 %v413
        %v777 = vunpack.c.l.b16 %v414
        %v778 = vunpack.c.h.b16 %v414
        %v779 = vunpack.c.l.b16 %v415
        %v780 = vunpack.c.h.b16 %v415
        %v781 = vunpack.c.l.b16 %v416
        %v782 = vunpack.c.h.b16 %v416
        %v783 = vunpack.c.l.b16 %v417
        %v784 = vunpack.c.h.b16 %v417
        %v785 = vunpack.c.l.b16 %v418
        %v786 = vunpack.c.h.b16 %v418
        %v787 = vunpack.c.l.b16 %v419
        %v788 = vunpack.c.h.b16 %v419
        %v789 = vunpack.c.l.b16 %v420
        %v790 = vunpack.c.h.b16 %v420
        %v791 = vunpack.c.l.b16 %v421
        %v792 = vunpack.c.h.b16 %v421
        %v793 = vunpack.c.l.b16 %v422
        %v794 = vunpack.c.h.b16 %v422
        %v795 = vunpack.c.l.b16 %v423
        %v796 = vunpack.c.h.b16 %v423
        %v797 = vunpack.c.l.b16 %v424
        %v798 = vunpack.c.h.b16 %v424
        %v799 = vunpack.c.l.b16 %v425
        %v800 = vunpack.c.h.b16 %v425
        %v801 = vunpack.c.l.b16 %v426
        %v802 = vunpack.c.h.b16 %v426
        %v803 = vunpack.c.l.b16 %v427
        %v804 = vunpack.c.h.b16 %v427
        %v805 = vunpack.c.l.b16 %v428
        %v806 = vunpack.c.h.b16 %v428
        %v807 = vunpack.c.l.b16 %v429
        %v808 = vunpack.c.h.b16 %v429
        %v809 = vunpack.c.l.b16 %v430
        %v810 = vunpack.c.h.b16 %v430
        %v811 = vunpack.c.l.b16 %v431
        %v812 = vunpack.c.h.b16 %v431
        %v813 = vunpack.c.l.b16 %v432
        %v814 = vunpack.c.h.b16 %v432
        %v815 = vunpack.c.l.b16 %v433
        %v816 = vunpack.c.h.b16 %v433
        %v817 = vunpack.c.l.b16 %v434
        %v818 = vunpack.c.h.b16 %v434
        %v819 = vpack.c.b16 %v567, %v563
        %v820 = vpack.c.b16 %v568, %v564
        %v821 = vpack.c.b16 %v569, %v565
        %v822 = vpack.c.b16 %v570, %v566
        %v823 = vpack.c.b16 %v575, %v571
        %v824 = vpack.c.b16 %v576, %v572
        %v825 = vpack.c.b16 %v577, %v573
        %v826 = vpack.c.b16 %v578, %v574
        %v827 = vpack.c.b16 %v583, %v579
        %v828 = vpack.c.b16 %v584, %v580
        %v829 = vpack.c.b16 %v585, %v581
        %v830 = vpack.c.b16 %v586, %v582
        %v831 = vpack.c.b16 %v591, %v587
        %v832 = vpack.c.b16 %v592, %v588
        %v833 = vpack.c.b16 %v593, %v589
        %v834 = vpack.c.b16 %v594, %v590
        %v835 = vpack.c.b16 %v599, %v595
        %v836 = vpack.c.b16 %v600, %v596
        %v837 = vpack.c.b16 %v601, %v597
        %v838 = vpack.c.b16 %v602, %v598
        %v839 = vpack.c.b16 %v607, %v603
        %v840 = vpack.c.b16 %v608, %v604
        %v841 = vpack.c.b16 %v609, %v605
        %v842 = vpack.c.b16 %v610, %v606
        %v843 = vpack.c.b16 %v615, %v611
        %v844 = vpack.c.b16 %v616, %v612
        %v845 = vpack.c.b16 %v617, %v613
        %v846 = vpack.c.b16 %v618, %v614
        %v847 = vpack.c.b16 %v623, %v619
        %v848 = vpack.c.b16 %v624, %v620
        %v849 = vpack.c.b16 %v625, %v621
        %v850 = vpack.c.b16 %v626, %v622
        %v851 = vpack.c.b16 %v631, %v627
        %v852 = vpack.c.b16 %v632, %v628
        %v853 = vpack.c.b16 %v633, %v629
        %v854 = vpack.c.b16 %v634, %v630
        %v855 = vpack.c.b16 %v639, %v635
        %v856 = vpack.c.b16 %v640, %v636
        %v857 = vpack.c.b16 %v641, %v637
        %v858 = vpack.c.b16 %v642, %v638
        %v859 = vpack.c.b16 %v647, %v643
        %v860 = vpack.c.b16 %v648, %v644
        %v861 = vpack.c.b16 %v649, %v645
        %v862 = vpack.c.b16 %v650, %v646
        %v863 = vpack.c.b16 %v655, %v651
        %v864 = vpack.c.b16 %v656, %v652
        %v865 = vpack.c.b16 %v657, %v653
        %v866 = vpack.c.b16 %v658, %v654
        %v867 = vpack.c.b16 %v663, %v659
        %v868 = vpack.c.b16 %v664, %v660
        %v869 = vpack.c.b16 %v665, %v661
        %v870 = vpack.c.b16 %v666, %v662
        %v871 = vpack.c.b16 %v671, %v667
        %v872 = vpack.c.b16 %v672, %v668
        %v873 = vpack.c.b16 %v673, %v669
        %v874 = vpack.c.b16 %v674, %v670
        %v875 = vpack.c.b16 %v679, %v675
        %v876 = vpack.c.b16 %v680, %v676
        %v877 = vpack.c.b16 %v681, %v677
        %v878 = vpack.c.b16 %v682, %v678
        %v879 = vpack.c.b16 %v687, %v683
        %v880 = vpack.c.b16 %v688, %v684
        %v881 = vpack.c.b16 %v689, %v685
        %v882 = vpack.c.b16 %v690, %v686
        %v883 = vpack.c.b16 %v695, %v691
        %v884 = vpack.c.b16 %v696, %v692
        %v885 = vpack.c.b16 %v697, %v693
        %v886 = vpack.c.b16 %v698, %v694
        %v887 = vpack.c.b16 %v703, %v699
        %v888 = vpack.c.b16 %v704, %v700
        %v889 = vpack.c.b16 %v705, %v701
        %v890 = vpack.c.b16 %v706, %v702
        %v891 = vpack.c.b16 %v711, %v707
        %v892 = vpack.c.b16 %v712, %v708
        %v893 = vpack.c.b16 %v713, %v709
        %v894 = vpack.c.b16 %v714, %v710
        %v895 = vpack.c.b16 %v719, %v715
        %v896 = vpack.c.b16 %v720, %v716
        %v897 = vpack.c.b16 %v721, %v717
        %v898 = vpack.c.b16 %v722, %v718
        %v899 = vpack.c.b16 %v727, %v723
        %v900 = vpack.c.b16 %v728, %v724
        %v901 = vpack.c.b16 %v729, %v725
        %v902 = vpack.c.b16 %v730, %v726
        %v903 = vpack.c.b16 %v735, %v731
        %v904 = vpack.c.b16 %v736, %v732
        %v905 = vpack.c.b16 %v737, %v733
        %v906 = vpack.c.b16 %v738, %v734
        %v907 = vpack.c.b16 %v743, %v739
        %v908 = vpack.c.b16 %v744, %v740
        %v909 = vpack.c.b16 %v745, %v741
        %v910 = vpack.c.b16 %v746, %v742
        %v911 = vpack.c.b16 %v751, %v747
        %v912 = vpack.c.b16 %v752, %v748
        %v913 = vpack.c.b16 %v753, %v749
        %v914 = vpack.c.b16 %v754, %v750
        %v915 = vpack.c.b16 %v759, %v755
        %v916 = vpack.c.b16 %v760, %v756
        %v917 = vpack.c.b16 %v761, %v757
        %v918 = vpack.c.b16 %v762, %v758
        %v919 = vpack.c.b16 %v767, %v763
        %v920 = vpack.c.b16 %v768, %v764
        %v921 = vpack.c.b16 %v769, %v765
        %v922 = vpack.c.b16 %v770, %v766
        %v923 = vpack.c.b16 %v775, %v771
        %v924 = vpack.c.b16 %v776, %v772
        %v925 = vpack.c.b16 %v777, %v773
        %v926 = vpack.c.b16 %v778, %v774
        %v927 = vpack.c.b16 %v783, %v779
        %v928 = vpack.c.b16 %v784, %v780
        %v929 = vpack.c.b16 %v785, %v781
        %v930 = vpack.c.b16 %v786, %v782
        %v931 = vpack.c.b16 %v791, %v787
        %v932 = vpack.c.b16 %v792, %v788
        %v933 = vpack.c.b16 %v793, %v789
        %v934 = vpack.c.b16 %v794, %v790
        %v935 = vpack.c.b16 %v799, %v795
        %v936 = vpack.c.b16 %v800, %v796
        %v937 = vpack.c.b16 %v801, %v797
        %v938 = vpack.c.b16 %v802, %v798
        %v939 = vpack.c.b16 %v807, %v803
        %v940 = vpack.c.b16 %v808, %v804
        %v941 = vpack.c.b16 %v809, %v805
        %v942 = vpack.c.b16 %v810, %v806
        %v943 = vpack.c.b16 %v815, %v811
        %v944 = vpack.c.b16 %v816, %v812
        %v945 = vpack.c.b16 %v817, %v813
        %v946 = vpack.c.b16 %v818, %v814
        %1075 = vmatpush.bf16.msra.mxu0 %v847
        %1076 = vmatpush.bf16.msra.mxu0 %v843
        %1077 = vmatpush.bf16.msra.mxu0 %v839
        %1078 = vmatpush.bf16.msra.mxu0 %v835
        %1079 = vmatpush.bf16.msra.mxu0 %v831
        %1080 = vmatpush.bf16.msra.mxu0 %v827
        %1081 = vmatpush.bf16.msra.mxu0 %v823
        %1082 = vmatpush.bf16.msra.mxu0 %v819
        %1083 = vmatmul.bf16.gmra.mxu0 %v302
        %v1084 = vpop.f32.mrf.mxu0
        %v1085 = vadd.f32 0.0, %v1084
        %v1086 = vpop.f32.mrf.mxu0
        %1087 = vdwg.mxu0
        %1088 = vmatpush.bf16.msra.mxu0 %v879
        %1089 = vmatpush.bf16.msra.mxu0 %v875
        %1090 = vmatpush.bf16.msra.mxu0 %v871
        %1091 = vmatpush.bf16.msra.mxu0 %v867
        %1092 = vmatpush.bf16.msra.mxu0 %v863
        %1093 = vmatpush.bf16.msra.mxu0 %v859
        %1094 = vmatpush.bf16.msra.mxu0 %v855
        %1095 = vmatpush.bf16.msra.mxu0 %v851
        %1096 = vmatmul.bf16.gmra.mxu0 %v303
        %v1097 = vpop.f32.mrf.mxu0
        %v1098 = vadd.f32 %v1085, %v1097
        %v1099 = vpop.f32.mrf.mxu0
        %1100 = vdwg.mxu0
        %1101 = vmatpush.bf16.msra.mxu0 %v911
        %1102 = vmatpush.bf16.msra.mxu0 %v907
        %1103 = vmatpush.bf16.msra.mxu0 %v903
        %1104 = vmatpush.bf16.msra.mxu0 %v899
        %1105 = vmatpush.bf16.msra.mxu0 %v895
        %1106 = vmatpush.bf16.msra.mxu0 %v891
        %1107 = vmatpush.bf16.msra.mxu0 %v887
        %1108 = vmatpush.bf16.msra.mxu0 %v883
        %1109 = vmatmul.bf16.gmra.mxu0 %v304
        %v1110 = vpop.f32.mrf.mxu0
        %v1111 = vadd.f32 %v1098, %v1110
        %v1112 = vpop.f32.mrf.mxu0
        %1113 = vdwg.mxu0
        %1114 = vmatpush.bf16.msra.mxu0 %v943
        %1115 = vmatpush.bf16.msra.mxu0 %v939
        %1116 = vmatpush.bf16.msra.mxu0 %v935
        %1117 = vmatpush.bf16.msra.mxu0 %v931
        %1118 = vmatpush.bf16.msra.mxu0 %v927
        %1119 = vmatpush.bf16.msra.mxu0 %v923
        %1120 = vmatpush.bf16.msra.mxu0 %v919
        %1121 = vmatpush.bf16.msra.mxu0 %v915
        %1122 = vmatmul.bf16.gmra.mxu0 %v305
        %v1123 = vpop.f32.mrf.mxu0
        %v1124 = vadd.f32 %v1111, %v1123
        %v1125 = vpop.f32.mrf.mxu0
        %1126 = vdwg.mxu0
        %1127 = vmatpush.bf16.msra.mxu0 %v848
        %1128 = vmatpush.bf16.msra.mxu0 %v844
        %1129 = vmatpush.bf16.msra.mxu0 %v840
        %1130 = vmatpush.bf16.msra.mxu0 %v836
        %1131 = vmatpush.bf16.msra.mxu0 %v832
        %1132 = vmatpush.bf16.msra.mxu0 %v828
        %1133 = vmatpush.bf16.msra.mxu0 %v824
        %1134 = vmatpush.bf16.msra.mxu0 %v820
        %1135 = vmatmul.bf16.gmra.mxu0 %v302
        %v1136 = vpop.f32.mrf.mxu0
        %v1137 = vadd.f32 0.0, %v1136
        %v1138 = vpop.f32.mrf.mxu0
        %1139 = vdwg.mxu0
        %1140 = vmatpush.bf16.msra.mxu0 %v880
        %1141 = vmatpush.bf16.msra.mxu0 %v876
        %1142 = vmatpush.bf16.msra.mxu0 %v872
        %1143 = vmatpush.bf16.msra.mxu0 %v868
        %1144 = vmatpush.bf16.msra.mxu0 %v864
        %1145 = vmatpush.bf16.msra.mxu0 %v860
        %1146 = vmatpush.bf16.msra.mxu0 %v856
        %1147 = vmatpush.bf16.msra.mxu0 %v852
        %1148 = vmatmul.bf16.gmra.mxu0 %v303
        %v1149 = vpop.f32.mrf.mxu0
        %v1150 = vadd.f32 %v1137, %v1149
        %v1151 = vpop.f32.mrf.mxu0
        %1152 = vdwg.mxu0
        %1153 = vmatpush.bf16.msra.mxu0 %v912
        %1154 = vmatpush.bf16.msra.mxu0 %v908
        %1155 = vmatpush.bf16.msra.mxu0 %v904
        %1156 = vmatpush.bf16.msra.mxu0 %v900
        %1157 = vmatpush.bf16.msra.mxu0 %v896
        %1158 = vmatpush.bf16.msra.mxu0 %v892
        %1159 = vmatpush.bf16.msra.mxu0 %v888
        %1160 = vmatpush.bf16.msra.mxu0 %v884
        %1161 = vmatmul.bf16.gmra.mxu0 %v304
        %v1162 = vpop.f32.mrf.mxu0
        %v1163 = vadd.f32 %v1150, %v1162
        %v1164 = vpop.f32.mrf.mxu0
        %1165 = vdwg.mxu0
        %1166 = vmatpush.bf16.msra.mxu0 %v944
        %1167 = vmatpush.bf16.msra.mxu0 %v940
        %1168 = vmatpush.bf16.msra.mxu0 %v936
        %1169 = vmatpush.bf16.msra.mxu0 %v932
        %1170 = vmatpush.bf16.msra.mxu0 %v928
        %1171 = vmatpush.bf16.msra.mxu0 %v924
        %1172 = vmatpush.bf16.msra.mxu0 %v920
        %1173 = vmatpush.bf16.msra.mxu0 %v916
        %1174 = vmatmul.bf16.gmra.mxu0 %v305
        %v1175 = vpop.f32.mrf.mxu0
        %v1176 = vadd.f32 %v1163, %v1175
        %v1177 = vpop.f32.mrf.mxu0
        %1178 = vdwg.mxu0
        %1179 = vmatpush.bf16.msra.mxu0 %v849
        %1180 = vmatpush.bf16.msra.mxu0 %v845
        %1181 = vmatpush.bf16.msra.mxu0 %v841
        %1182 = vmatpush.bf16.msra.mxu0 %v837
        %1183 = vmatpush.bf16.msra.mxu0 %v833
        %1184 = vmatpush.bf16.msra.mxu0 %v829
        %1185 = vmatpush.bf16.msra.mxu0 %v825
        %1186 = vmatpush.bf16.msra.mxu0 %v821
        %1187 = vmatmul.bf16.gmra.mxu0 %v302
        %v1188 = vpop.f32.mrf.mxu0
        %v1189 = vadd.f32 0.0, %v1188
        %v1190 = vpop.f32.mrf.mxu0
        %1191 = vdwg.mxu0
        %1192 = vmatpush.bf16.msra.mxu0 %v881
        %1193 = vmatpush.bf16.msra.mxu0 %v877
        %1194 = vmatpush.bf16.msra.mxu0 %v873
        %1195 = vmatpush.bf16.msra.mxu0 %v869
        %1196 = vmatpush.bf16.msra.mxu0 %v865
        %1197 = vmatpush.bf16.msra.mxu0 %v861
        %1198 = vmatpush.bf16.msra.mxu0 %v857
        %1199 = vmatpush.bf16.msra.mxu0 %v853
        %1200 = vmatmul.bf16.gmra.mxu0 %v303
        %v1201 = vpop.f32.mrf.mxu0
        %v1202 = vadd.f32 %v1189, %v1201
        %v1203 = vpop.f32.mrf.mxu0
        %1204 = vdwg.mxu0
        %1205 = vmatpush.bf16.msra.mxu0 %v913
        %1206 = vmatpush.bf16.msra.mxu0 %v909
        %1207 = vmatpush.bf16.msra.mxu0 %v905
        %1208 = vmatpush.bf16.msra.mxu0 %v901
        %1209 = vmatpush.bf16.msra.mxu0 %v897
        %1210 = vmatpush.bf16.msra.mxu0 %v893
        %1211 = vmatpush.bf16.msra.mxu0 %v889
        %1212 = vmatpush.bf16.msra.mxu0 %v885
        %1213 = vmatmul.bf16.gmra.mxu0 %v304
        %v1214 = vpop.f32.mrf.mxu0
        %v1215 = vadd.f32 %v1202, %v1214
        %v1216 = vpop.f32.mrf.mxu0
        %1217 = vdwg.mxu0
        %1218 = vmatpush.bf16.msra.mxu0 %v945
        %1219 = vmatpush.bf16.msra.mxu0 %v941
        %1220 = vmatpush.bf16.msra.mxu0 %v937
        %1221 = vmatpush.bf16.msra.mxu0 %v933
        %1222 = vmatpush.bf16.msra.mxu0 %v929
        %1223 = vmatpush.bf16.msra.mxu0 %v925
        %1224 = vmatpush.bf16.msra.mxu0 %v921
        %1225 = vmatpush.bf16.msra.mxu0 %v917
        %1226 = vmatmul.bf16.gmra.mxu0 %v305
        %v1227 = vpop.f32.mrf.mxu0
        %v1228 = vadd.f32 %v1215, %v1227
        %v1229 = vpop.f32.mrf.mxu0
        %1230 = vdwg.mxu0
        %1231 = vmatpush.bf16.msra.mxu0 %v850
        %1232 = vmatpush.bf16.msra.mxu0 %v846
        %1233 = vmatpush.bf16.msra.mxu0 %v842
        %1234 = vmatpush.bf16.msra.mxu0 %v838
        %1235 = vmatpush.bf16.msra.mxu0 %v834
        %1236 = vmatpush.bf16.msra.mxu0 %v830
        %1237 = vmatpush.bf16.msra.mxu0 %v826
        %1238 = vmatpush.bf16.msra.mxu0 %v822
        %1239 = vmatmul.bf16.gmra.mxu0 %v302
        %v1240 = vpop.f32.mrf.mxu0
        %v1241 = vadd.f32 0.0, %v1240
        %v1242 = vpop.f32.mrf.mxu0
        %1243 = vdwg.mxu0
        %1244 = vmatpush.bf16.msra.mxu0 %v882
        %1245 = vmatpush.bf16.msra.mxu0 %v878
        %1246 = vmatpush.bf16.msra.mxu0 %v874
        %1247 = vmatpush.bf16.msra.mxu0 %v870
        %1248 = vmatpush.bf16.msra.mxu0 %v866
        %1249 = vmatpush.bf16.msra.mxu0 %v862
        %1250 = vmatpush.bf16.msra.mxu0 %v858
        %1251 = vmatpush.bf16.msra.mxu0 %v854
        %1252 = vmatmul.bf16.gmra.mxu0 %v303
        %v1253 = vpop.f32.mrf.mxu0
        %v1254 = vadd.f32 %v1241, %v1253
        %v1255 = vpop.f32.mrf.mxu0
        %1256 = vdwg.mxu0
        %1257 = vmatpush.bf16.msra.mxu0 %v914
        %1258 = vmatpush.bf16.msra.mxu0 %v910
        %1259 = vmatpush.bf16.msra.mxu0 %v906
        %1260 = vmatpush.bf16.msra.mxu0 %v902
        %1261 = vmatpush.bf16.msra.mxu0 %v898
        %1262 = vmatpush.bf16.msra.mxu0 %v894
        %1263 = vmatpush.bf16.msra.mxu0 %v890
        %1264 = vmatpush.bf16.msra.mxu0 %v886
        %1265 = vmatmul.bf16.gmra.mxu0 %v304
        %v1266 = vpop.f32.mrf.mxu0
        %v1267 = vadd.f32 %v1254, %v1266
        %v1268 = vpop.f32.mrf.mxu0
        %1269 = vdwg.mxu0
        %1270 = vmatpush.bf16.msra.mxu0 %v946
        %1271 = vmatpush.bf16.msra.mxu0 %v942
        %1272 = vmatpush.bf16.msra.mxu0 %v938
        %1273 = vmatpush.bf16.msra.mxu0 %v934
        %1274 = vmatpush.bf16.msra.mxu0 %v930
        %1275 = vmatpush.bf16.msra.mxu0 %v926
        %1276 = vmatpush.bf16.msra.mxu0 %v922
        %1277 = vmatpush.bf16.msra.mxu0 %v918
        %1278 = vmatmul.bf16.gmra.mxu0 %v305
        %v1279 = vpop.f32.mrf.mxu0
        %v1280 = vadd.f32 %v1267, %v1279
        %v1281 = vpop.f32.mrf.mxu0
        %1282 = vdwg.mxu0
        %v1287 = vrot.slane %v1176, 6
        %v1288 = vrot.slane %v1228, 4
        %v1289 = vrot.slane %v1280, 2
        %vm1290 = vcmask 1041408
        %v1291 = vsel %vm1290, %v1124, %v1287
        %vm1292 = vcmask 1045508
        %v1293 = vsel %vm1292, %v1288, %v1289
        %vm1294 = vcmask 1043456
        %v1295 = vsel %vm1294, %v1291, %v1293
        %v1297 = vadd.f32 %v306, %v1295
        %1298 = vst [vmem:[#allocation2] sm:$0xff] %v1297
        %p1299 = scmp.eq.s32.totalorder %s27, 1
        // Predicated region
        $region53: #{tpu_custom_call.1} parent=35 // pred_check
          %p1300 = pneg %p1299
        $region54: #{tpu_custom_call.1} parent=35 // pred_check_branch
          %1302 = sbr.rel (%p1300) target = $region56
        $region55: #{tpu_custom_call.1} parent=35 // pred_region
          %v1303 = vld [vmem:[#allocation2] sm:$0xff]
          %1305 = vst [vmem:[#allocation1] ss:$4 sm:$0xff] %v1303
          %v1306 = vld.sshfl [vmem:[#allocation1] sm:$0xff pattern:$0x73625140]
          %v1307 = vld.sshfl [vmem:[#allocation1 + $0x8] sm:$0xff pattern:$0x73625140]
          %v1308 = vld.sshfl [vmem:[#allocation1 + $0x10] sm:$0xff pattern:$0x73625140]
          %v1309 = vld.sshfl [vmem:[#allocation1 + $0x18] sm:$0xff pattern:$0x73625140]
          %v1314 = vpack.c.bf16 %v1306, %v1306
          %v1315 = vpack.c.bf16 %v1307, %v1307
          %v1316 = vpack.c.bf16 %v1308, %v1308
          %v1317 = vpack.c.bf16 %v1309, %v1309
          %v1318 = vld [vmem:[#allocation8] sm:$0xf]
          %v1319 = vld [vmem:[#allocation8 + $0x4] sm:$0xf]
          %v1320 = vld [vmem:[#allocation8 + $0x8] sm:$0xf]
          %v1321 = vld [vmem:[#allocation8 + $0xc] sm:$0xf]
          %v1322 = vld [vmem:[#allocation8 + $0x10] sm:$0xf]
          %v1323 = vld [vmem:[#allocation8 + $0x14] sm:$0xf]
          %v1324 = vld [vmem:[#allocation8 + $0x18] sm:$0xf]
          %v1325 = vld [vmem:[#allocation8 + $0x1c] sm:$0xf]
          %v1326 = vld [vmem:[#allocation8 + $0x20] sm:$0xf]
          %v1327 = vld [vmem:[#allocation8 + $0x24] sm:$0xf]
          %v1328 = vld [vmem:[#allocation8 + $0x28] sm:$0xf]
          %v1329 = vld [vmem:[#allocation8 + $0x2c] sm:$0xf]
          %v1330 = vld [vmem:[#allocation8 + $0x30] sm:$0xf]
          %v1331 = vld [vmem:[#allocation8 + $0x34] sm:$0xf]
          %v1332 = vld [vmem:[#allocation8 + $0x38] sm:$0xf]
          %v1333 = vld [vmem:[#allocation8 + $0x3c] sm:$0xf]
          %v1334 = vld [vmem:[#allocation8 + $0x40] sm:$0xf]
          %v1335 = vld [vmem:[#allocation8 + $0x44] sm:$0xf]
          %v1336 = vld [vmem:[#allocation8 + $0x48] sm:$0xf]
          %v1337 = vld [vmem:[#allocation8 + $0x4c] sm:$0xf]
          %v1338 = vld [vmem:[#allocation8 + $0x50] sm:$0xf]
          %v1339 = vld [vmem:[#allocation8 + $0x54] sm:$0xf]
          %v1340 = vld [vmem:[#allocation8 + $0x58] sm:$0xf]
          %v1341 = vld [vmem:[#allocation8 + $0x5c] sm:$0xf]
          %v1342 = vld [vmem:[#allocation8 + $0x60] sm:$0xf]
          %v1343 = vld [vmem:[#allocation8 + $0x64] sm:$0xf]
          %v1344 = vld [vmem:[#allocation8 + $0x68] sm:$0xf]
          %v1345 = vld [vmem:[#allocation8 + $0x6c] sm:$0xf]
          %v1346 = vld [vmem:[#allocation8 + $0x70] sm:$0xf]
          %v1347 = vld [vmem:[#allocation8 + $0x74] sm:$0xf]
          %v1348 = vld [vmem:[#allocation8 + $0x78] sm:$0xf]
          %v1349 = vld [vmem:[#allocation8 + $0x7c] sm:$0xf]
          %v1350 = vld [vmem:[#allocation8 + $0x80] sm:$0xf]
          %v1351 = vld [vmem:[#allocation8 + $0x84] sm:$0xf]
          %v1352 = vld [vmem:[#allocation8 + $0x88] sm:$0xf]
          %v1353 = vld [vmem:[#allocation8 + $0x8c] sm:$0xf]
          %v1354 = vld [vmem:[#allocation8 + $0x90] sm:$0xf]
          %v1355 = vld [vmem:[#allocation8 + $0x94] sm:$0xf]
          %v1356 = vld [vmem:[#allocation8 + $0x98] sm:$0xf]
          %v1357 = vld [vmem:[#allocation8 + $0x9c] sm:$0xf]
          %v1358 = vld [vmem:[#allocation8 + $0xa0] sm:$0xf]
          %v1359 = vld [vmem:[#allocation8 + $0xa4] sm:$0xf]
          %v1360 = vld [vmem:[#allocation8 + $0xa8] sm:$0xf]
          %v1361 = vld [vmem:[#allocation8 + $0xac] sm:$0xf]
          %v1362 = vld [vmem:[#allocation8 + $0xb0] sm:$0xf]
          %v1363 = vld [vmem:[#allocation8 + $0xb4] sm:$0xf]
          %v1364 = vld [vmem:[#allocation8 + $0xb8] sm:$0xf]
          %v1365 = vld [vmem:[#allocation8 + $0xbc] sm:$0xf]
          %v1366 = vld [vmem:[#allocation8 + $0xc0] sm:$0xf]
          %v1367 = vld [vmem:[#allocation8 + $0xc4] sm:$0xf]
          %v1368 = vld [vmem:[#allocation8 + $0xc8] sm:$0xf]
          %v1369 = vld [vmem:[#allocation8 + $0xcc] sm:$0xf]
          %v1370 = vld [vmem:[#allocation8 + $0xd0] sm:$0xf]
          %v1371 = vld [vmem:[#allocation8 + $0xd4] sm:$0xf]
          %v1372 = vld [vmem:[#allocation8 + $0xd8] sm:$0xf]
          %v1373 = vld [vmem:[#allocation8 + $0xdc] sm:$0xf]
          %v1374 = vld [vmem:[#allocation8 + $0xe0] sm:$0xf]
          %v1375 = vld [vmem:[#allocation8 + $0xe4] sm:$0xf]
          %v1376 = vld [vmem:[#allocation8 + $0xe8] sm:$0xf]
          %v1377 = vld [vmem:[#allocation8 + $0xec] sm:$0xf]
          %v1378 = vld [vmem:[#allocation8 + $0xf0] sm:$0xf]
          %v1379 = vld [vmem:[#allocation8 + $0xf4] sm:$0xf]
          %v1380 = vld [vmem:[#allocation8 + $0xf8] sm:$0xf]
          %v1381 = vld [vmem:[#allocation8 + $0xfc] sm:$0xf]
          %v1382 = vld [vmem:[%s3] sm:$0x1]
          %v1384 = vperm.slane %v1382, 0
          %v1450 = vunpack.c.l.b16 %v1318
          %v1451 = vunpack.c.l.b16 %v1319
          %v1452 = vunpack.c.l.b16 %v1320
          %v1453 = vunpack.c.l.b16 %v1321
          %v1454 = vunpack.c.l.b16 %v1322
          %v1455 = vunpack.c.l.b16 %v1323
          %v1456 = vunpack.c.l.b16 %v1324
          %v1457 = vunpack.c.l.b16 %v1325
          %v1458 = vunpack.c.l.b16 %v1326
          %v1459 = vunpack.c.l.b16 %v1327
          %v1460 = vunpack.c.l.b16 %v1328
          %v1461 = vunpack.c.l.b16 %v1329
          %v1462 = vunpack.c.l.b16 %v1330
          %v1463 = vunpack.c.l.b16 %v1331
          %v1464 = vunpack.c.l.b16 %v1332
          %v1465 = vunpack.c.l.b16 %v1333
          %v1466 = vunpack.c.l.b16 %v1334
          %v1467 = vunpack.c.l.b16 %v1335
          %v1468 = vunpack.c.l.b16 %v1336
          %v1469 = vunpack.c.l.b16 %v1337
          %v1470 = vunpack.c.l.b16 %v1338
          %v1471 = vunpack.c.l.b16 %v1339
          %v1472 = vunpack.c.l.b16 %v1340
          %v1473 = vunpack.c.l.b16 %v1341
          %v1474 = vunpack.c.l.b16 %v1342
          %v1475 = vunpack.c.l.b16 %v1343
          %v1476 = vunpack.c.l.b16 %v1344
          %v1477 = vunpack.c.l.b16 %v1345
          %v1478 = vunpack.c.l.b16 %v1346
          %v1479 = vunpack.c.l.b16 %v1347
          %v1480 = vunpack.c.l.b16 %v1348
          %v1481 = vunpack.c.l.b16 %v1349
          %v1482 = vunpack.c.l.b16 %v1350
          %v1483 = vunpack.c.l.b16 %v1351
          %v1484 = vunpack.c.l.b16 %v1352
          %v1485 = vunpack.c.l.b16 %v1353
          %v1486 = vunpack.c.l.b16 %v1354
          %v1487 = vunpack.c.l.b16 %v1355
          %v1488 = vunpack.c.l.b16 %v1356
          %v1489 = vunpack.c.l.b16 %v1357
          %v1490 = vunpack.c.l.b16 %v1358
          %v1491 = vunpack.c.l.b16 %v1359
          %v1492 = vunpack.c.l.b16 %v1360
          %v1493 = vunpack.c.l.b16 %v1361
          %v1494 = vunpack.c.l.b16 %v1362
          %v1495 = vunpack.c.l.b16 %v1363
          %v1496 = vunpack.c.l.b16 %v1364
          %v1497 = vunpack.c.l.b16 %v1365
          %v1498 = vunpack.c.l.b16 %v1366
          %v1499 = vunpack.c.l.b16 %v1367
          %v1500 = vunpack.c.l.b16 %v1368
          %v1501 = vunpack.c.l.b16 %v1369
          %v1502 = vunpack.c.l.b16 %v1370
          %v1503 = vunpack.c.l.b16 %v1371
          %v1504 = vunpack.c.l.b16 %v1372
          %v1505 = vunpack.c.l.b16 %v1373
          %v1506 = vunpack.c.l.b16 %v1374
          %v1507 = vunpack.c.l.b16 %v1375
          %v1508 = vunpack.c.l.b16 %v1376
          %v1509 = vunpack.c.l.b16 %v1377
          %v1510 = vunpack.c.l.b16 %v1378
          %v1511 = vunpack.c.l.b16 %v1379
          %v1512 = vunpack.c.l.b16 %v1380
          %v1513 = vunpack.c.l.b16 %v1381
          %v1514 = vpack.c.b16 %v1451, %v1450
          %v1515 = vpack.c.b16 %v1453, %v1452
          %v1516 = vpack.c.b16 %v1455, %v1454
          %v1517 = vpack.c.b16 %v1457, %v1456
          %v1518 = vpack.c.b16 %v1459, %v1458
          %v1519 = vpack.c.b16 %v1461, %v1460
          %v1520 = vpack.c.b16 %v1463, %v1462
          %v1521 = vpack.c.b16 %v1465, %v1464
          %v1522 = vpack.c.b16 %v1467, %v1466
          %v1523 = vpack.c.b16 %v1469, %v1468
          %v1524 = vpack.c.b16 %v1471, %v1470
          %v1525 = vpack.c.b16 %v1473, %v1472
          %v1526 = vpack.c.b16 %v1475, %v1474
          %v1527 = vpack.c.b16 %v1477, %v1476
          %v1528 = vpack.c.b16 %v1479, %v1478
          %v1529 = vpack.c.b16 %v1481, %v1480
          %v1530 = vpack.c.b16 %v1483, %v1482
          %v1531 = vpack.c.b16 %v1485, %v1484
          %v1532 = vpack.c.b16 %v1487, %v1486
          %v1533 = vpack.c.b16 %v1489, %v1488
          %v1534 = vpack.c.b16 %v1491, %v1490
          %v1535 = vpack.c.b16 %v1493, %v1492
          %v1536 = vpack.c.b16 %v1495, %v1494
          %v1537 = vpack.c.b16 %v1497, %v1496
          %v1538 = vpack.c.b16 %v1499, %v1498
          %v1539 = vpack.c.b16 %v1501, %v1500
          %v1540 = vpack.c.b16 %v1503, %v1502
          %v1541 = vpack.c.b16 %v1505, %v1504
          %v1542 = vpack.c.b16 %v1507, %v1506
          %v1543 = vpack.c.b16 %v1509, %v1508
          %v1544 = vpack.c.b16 %v1511, %v1510
          %v1545 = vpack.c.b16 %v1513, %v1512
          %1578 = vmatpush.bf16.msra.mxu0 %v1521
          %1579 = vmatpush.bf16.msra.mxu0 %v1520
          %1580 = vmatpush.bf16.msra.mxu0 %v1519
          %1581 = vmatpush.bf16.msra.mxu0 %v1518
          %1582 = vmatpush.bf16.msra.mxu0 %v1517
          %1583 = vmatpush.bf16.msra.mxu0 %v1516
          %1584 = vmatpush.bf16.msra.mxu0 %v1515
          %1585 = vmatpush.bf16.msra.mxu0 %v1514
          %1586 = vmatmul.bf16.gmra.mxu0 %v1314
          %v1587 = vpop.f32.mrf.mxu0
          %v1588 = vadd.f32 %v1384, %v1587
          %v1589 = vpop.f32.mrf.mxu0
          %1590 = vdwg.mxu0
          %1591 = vmatpush.bf16.msra.mxu0 %v1529
          %1592 = vmatpush.bf16.msra.mxu0 %v1528
          %1593 = vmatpush.bf16.msra.mxu0 %v1527
          %1594 = vmatpush.bf16.msra.mxu0 %v1526
          %1595 = vmatpush.bf16.msra.mxu0 %v1525
          %1596 = vmatpush.bf16.msra.mxu0 %v1524
          %1597 = vmatpush.bf16.msra.mxu0 %v1523
          %1598 = vmatpush.bf16.msra.mxu0 %v1522
          %1599 = vmatmul.bf16.gmra.mxu0 %v1315
          %v1600 = vpop.f32.mrf.mxu0
          %v1601 = vadd.f32 %v1588, %v1600
          %v1602 = vpop.f32.mrf.mxu0
          %1603 = vdwg.mxu0
          %1604 = vmatpush.bf16.msra.mxu0 %v1537
          %1605 = vmatpush.bf16.msra.mxu0 %v1536
          %1606 = vmatpush.bf16.msra.mxu0 %v1535
          %1607 = vmatpush.bf16.msra.mxu0 %v1534
          %1608 = vmatpush.bf16.msra.mxu0 %v1533
          %1609 = vmatpush.bf16.msra.mxu0 %v1532
          %1610 = vmatpush.bf16.msra.mxu0 %v1531
          %1611 = vmatpush.bf16.msra.mxu0 %v1530
          %1612 = vmatmul.bf16.gmra.mxu0 %v1316
          %v1613 = vpop.f32.mrf.mxu0
          %v1614 = vadd.f32 %v1601, %v1613
          %v1615 = vpop.f32.mrf.mxu0
          %1616 = vdwg.mxu0
          %1617 = vmatpush.bf16.msra.mxu0 %v1545
          %1618 = vmatpush.bf16.msra.mxu0 %v1544
          %1619 = vmatpush.bf16.msra.mxu0 %v1543
          %1620 = vmatpush.bf16.msra.mxu0 %v1542
          %1621 = vmatpush.bf16.msra.mxu0 %v1541
          %1622 = vmatpush.bf16.msra.mxu0 %v1540
          %1623 = vmatpush.bf16.msra.mxu0 %v1539
          %1624 = vmatpush.bf16.msra.mxu0 %v1538
          %1625 = vmatmul.bf16.gmra.mxu0 %v1317
          %v1626 = vpop.f32.mrf.mxu0
          %v1627 = vadd.f32 %v1614, %v1626
          %v1628 = vpop.f32.mrf.mxu0
          %1629 = vdwg.mxu0
          %1630 = vst [vmem:[#allocation9] sm:$0x3] %v1627
        $region56: #{tpu_custom_call.1} parent=35 // pred_fallthru
          _
        // Predicated region
        $region57: #{tpu_custom_call.1} parent=35 // pred_check
          %p1631 = pneg %p148
        $region58: #{tpu_custom_call.1} parent=35 // pred_check_branch
          %1633 = sbr.rel (%p1631) target = $region60
        $region59: #{tpu_custom_call.1} parent=35 // pred_region
          %1635 = vsyncadd [#allocation5], 0
          %s1636 = smul.addr %s26, 2
          %s1637 = scalar_lea.hbm %s4, %s1636
          %s1639 = sshll.u32 [#allocation9], 4
          %s1640 = int_to_ptr.vmem [resolvable:$true] %s1639
          %s1641 = sshll.u32 %s1637, 4
          %s1642 = int_to_ptr.hbm [resolvable:$true] %s1641
          %1644 = dma.vmem_to_hbm [thread:$0]  %s1640, 32, %s1642, [#allocation5]
        $region60: #{tpu_custom_call.1} parent=35 // pred_fallthru
          _
        // Predicated region
        $region61: #{tpu_custom_call.1} parent=35 // pred_check
          %p1645 = pneg %p148
        $region62: #{tpu_custom_call.1} parent=35 // pred_check_branch
          %1647 = sbr.rel (%p1645) target = $region64
        $region63: #{tpu_custom_call.1} parent=35 // pred_region
          %1649 = dma.done [#allocation5], 32
        $region64: #{tpu_custom_call.1} parent=35 // pred_fallthru
          _
      $region36: #{tpu_custom_call.1} parent=5 // pred_fallthru
        _
      %p1650 = scmp.le.s32.totalorder 2, %s17
      // Predicated region
      $region65: #{tpu_custom_call.1} parent=5 // pred_check
        %p1651 = pneg %p1650
      $region66: #{tpu_custom_call.1} parent=5 // pred_check_branch
        %1653 = sbr.rel (%p1651) target = $region68
      $region67: #{tpu_custom_call.1} parent=5 // pred_region
        %s1654 = ssub.s32 %s17, 2
      $region68: #{tpu_custom_call.1} parent=5 // pred_fallthru
        _
    $region6: #{tpu_custom_call.1} parent=1 // loop_footer
      %s21 = sadd.s32 1, %s17
    $region7: #{tpu_custom_call.1} parent=1 // loop_footer_branch
      %16 = sbr.rel target = $region3
    $region8: #{tpu_custom_call.1} parent=1 // loop_exit
      _
    %1655 = vsyncpa [#allocation4], 1
    %s1656 = scalar_lea.sflag [#allocation4], 1
    %1657 = vsyncpa %s1656, 1
    %1658 = vsyncpa [#allocation7], 1
    %s1659 = scalar_lea.sflag [#allocation7], 1
    %1660 = vsyncpa %s1659, 1
    %1661 = vsyncpa [#allocation5], 1
    %s1662 = scalar_lea.sflag [#allocation5], 1
    %1663 = vsyncpa %s1662, 1

</llo_original>
